<compile_context>
chip_gen: v7x
topology: tpu7x:2x2x1
jax: 0.10.0
libtpu: 0.0.40
codegen_flags: <defaults>
</compile_context>

<pallas_src>
import jax
import jax.numpy as jnp
import numpy as np
from jax.experimental import pallas as pl
from jax.experimental.pallas import tpu as pltpu


def _avgpool_kernel(x_ref, p_ref, o_ref):
    # x_ref: (TM, 2*W*K)        packed row-pairs (K pooled rows per lane-row)
    # p_ref: (2*W*K, LOUT_PAD)  constant bf16 pooling matrix (0.25 entries)
    # o_ref: (TM, LOUT_PAD)
    xv = x_ref[...]
    if xv.dtype != p_ref.dtype:          # f32 -> bf16 for the fast MXU path;
        xv = xv.astype(p_ref.dtype)      # bf16 inputs pass through natively.
    o_ref[...] = jnp.dot(
        xv, p_ref[...], preferred_element_type=jnp.float32
    ).astype(o_ref.dtype)


def _pool_matrix(W, k, lout_pad, dtype):
    """(2*W*k, lout_pad) matrix folding the 2x2 average into one matmul.

    Packed input lane layout per row: k segments of 2*W lanes, each segment =
    [top source row (W cols), bottom source row (W cols)] of one pooled row.
    Packed output lane layout: k segments of W//2 lanes (+ zero pad columns).
    """
    w_half = W // 2
    P = np.zeros((2 * W * k, lout_pad), np.float32)
    for p in range(k):            # packed pooled-row index within the lane-row
        for s in range(2):        # top / bottom source row of the pair
            for w in range(W):    # source column
                P[p * 2 * W + s * W + w, p * w_half + w // 2] = 0.25
    return jnp.asarray(P, dtype=dtype)    # 0.25 is exact in bf16


def _choose_pack(n_rows, w_half, max_lanes=256):
    """Largest k dividing n_rows with k*w_half <= max_lanes, preferring a
    lane-dense (multiple of 128) packed output width."""
    kmax = max(1, max_lanes // max(1, w_half))
    divs = [k for k in range(1, kmax + 1) if n_rows % k == 0] or [1]
    dense = [k for k in divs if (k * w_half) % 128 == 0]
    return (dense or divs)[-1]


def _choose_tile(mp, cap=1024):
    """Row tile: large (up to `cap`), multiple of 8, and split into >=2 blocks
    whenever there is enough work so both v7x TensorCores participate.
    Prefers a tile that divides mp (avoids a ragged trailing block)."""
    if mp <= 8:
        return mp                                   # full extent (legal block)
    cap = min(cap, max(8, -(-((mp + 1) // 2) // 8) * 8))   # force >=2 blocks
    t = (cap // 8) * 8
    while t >= 8:
        if mp % t == 0:
            return t
        t -= 8
    return (cap // 8) * 8                           # fall back to ragged tail


def downsample_forward(x):
    """AvgPool2d(2, 2) on NCHW input, via a single Pallas TPU kernel."""
    N, C, H, W = x.shape
    # AvgPool2d(2,2) floor-drops a trailing odd row/col.
    if H % 2 or W % 2:
        x = x[:, :, : 2 * (H // 2), : 2 * (W // 2)]
    H2, W2 = H // 2, W // 2
    assert H2 > 0 and W2 > 0, "spatial dims too small for AvgPool2d(2,2)"
    W = 2 * W2

    n_rows = N * C * H2                      # number of pooled output rows
    k = _choose_pack(n_rows, W2)             # pooled rows packed per lane-row
    mp = n_rows // k                         # packed rows
    lin = 2 * W * k                          # packed input lane width
    lout = W2 * k                            # packed output lane width

    # Lane-dense output: pad pool-matrix columns to a 128 multiple when cheap.
    lout_pad = lout
    if lout % 128 != 0:
        cand = -(-lout // 128) * 128
        if (cand - lout) * 3 <= lout:        # <= ~33% extra store traffic
            lout_pad = cand

    xp = x.reshape(mp, lin)                  # free row-major reshape
    mxu_dtype = jnp.bfloat16 if x.dtype == jnp.float32 else x.dtype
    pmat = _pool_matrix(W, k, lout_pad, mxu_dtype)

    tm = _choose_tile(mp)
    grid = (pl.cdiv(mp, tm),)

    # VMEM budget: double-buffered input + output tiles, constant pool matrix,
    # in-kernel bf16 cast temp; ~30% headroom + 2 MiB slack.
    x_bytes = jnp.dtype(x.dtype).itemsize
    p_bytes = jnp.dtype(mxu_dtype).itemsize
    need = (2 * tm * lin * x_bytes
            + 2 * tm * lout_pad * x_bytes
            + 2 * lin * lout_pad * p_bytes
            + tm * lin * p_bytes)
    vmem_limit = int(need * 1.3) + (2 << 20)

    out = pl.pallas_call(
        _avgpool_kernel,
        out_shape=jax.ShapeDtypeStruct((mp, lout_pad), x.dtype),
        grid=grid,
        in_specs=[
            pl.BlockSpec((tm, lin), lambda i: (i, 0)),       # packed rows
            pl.BlockSpec((lin, lout_pad), lambda i: (0, 0)), # constant matrix
        ],
        out_specs=pl.BlockSpec((tm, lout_pad), lambda i: (i, 0)),
        compiler_params=pltpu.CompilerParams(
            dimension_semantics=("parallel",),
            vmem_limit_bytes=vmem_limit,
        ),
    )(xp, pmat)

    if lout_pad != lout:
        out = out[:, :lout]                  # drop lane padding
    return out.reshape(N, C, H2, W2)


def ref_downsample(x):
    """Pure-JAX reference: AvgPool2d(2, 2) on NCHW."""
    N, C, H, W = x.shape
    x = x[:, :, : 2 * (H // 2), : 2 * (W // 2)]
    return x.reshape(N, C, H // 2, 2, W // 2, 2).mean(axis=(3, 5))


if __name__ == "__main__":
    N, C, H, W = 2, 4, 16, 16
    key = jax.random.PRNGKey(0)
    x = jax.random.normal(key, (N, C, H, W), jnp.float32)

    out = downsample_forward(x)
    out = jax.block_until_ready(out)

    ref = ref_downsample(x)
    assert out.shape == (N, C, H // 2, W // 2)
    # Tolerance absorbs the intentional bf16 MXU path (~2^-9 relative error);
    # layout/index bugs would produce O(1) errors and still fail this.
    np.testing.assert_allclose(np.asarray(out), np.asarray(ref),
                               atol=2e-2, rtol=2e-2)
    print("KERNEL_OK")
</pallas_src>

<mosaic_0001>
module attributes {stable_mosaic.version = 11 : i64} {
  func.func @_avgpool_kernel(%arg0: i32, %arg1: memref<2x1024xf32, #tpu.memory_space<vmem>>, %arg2: memref<1024x256xbf16, #tpu.memory_space<vmem>>, %arg3: memref<2x256xf32, #tpu.memory_space<vmem>>) attributes {dimension_semantics = [#tpu.dimension_semantics<parallel>], iteration_bounds = array<i64: 1>, scalar_prefetch = 0 : i64, scratch_operands = 0 : i64, tpu.core_type = #tpu.core_type<tc>, window_params = [{transform_indices = @transform_0, window_bounds = array<i64: 2, 1024>}, {pipeline_mode = #tpu.pipeline_mode<synchronous>, transform_indices = @transform_1, window_bounds = array<i64: 1024, 256>}, {transform_indices = @transform_2, window_bounds = array<i64: 2, 256>}]} {
    %c0 = arith.constant 0 : index
    %c0_0 = arith.constant 0 : index
    %0 = vector.load %arg1[%c0, %c0_0] : memref<2x1024xf32, #tpu.memory_space<vmem>>, vector<2x1024xf32>
    %1 = arith.truncf %0 : vector<2x1024xf32> to vector<2x1024xbf16>
    %c0_1 = arith.constant 0 : index
    %c0_2 = arith.constant 0 : index
    %2 = vector.load %arg2[%c0_1, %c0_2] : memref<1024x256xbf16, #tpu.memory_space<vmem>>, vector<1024x256xbf16>
    %cst = arith.constant dense<0.000000e+00> : vector<2x256xf32>
    %3 = tpu.matmul %1, %2, %cst {dimension_numbers = #tpu.dot_dimension_numbers<[1], [0], [0], [1], [0, 0, 1, 1], [], []>} : vector<2x1024xbf16>, vector<1024x256xbf16>, vector<2x256xf32> -> vector<2x256xf32>
    %c0_3 = arith.constant 0 : index
    %c0_4 = arith.constant 0 : index
    %4 = vector.load %arg3[%c0_3, %c0_4] : memref<2x256xf32, #tpu.memory_space<vmem>>, vector<2x256xf32>
    tpu.vector_store %arg3[%c0_3, %c0_4], %3 {strides = array<i32>} : memref<2x256xf32, #tpu.memory_space<vmem>>, vector<2x256xf32>,
    return
  }
  func.func @transform_0(%arg0: i32) -> (i32, i32) {
    %c0_i32 = arith.constant 0 : i32
    %c0_i32_0 = arith.constant 0 : i32
    return %arg0, %c0_i32 : i32, i32
  }
  func.func @transform_1(%arg0: i32) -> (i32, i32) {
    %c0_i32 = arith.constant 0 : i32
    %c0_i32_0 = arith.constant 0 : i32
    %c0_i32_1 = arith.constant 0 : i32
    return %c0_i32, %c0_i32_0 : i32, i32
  }
  func.func @transform_2(%arg0: i32) -> (i32, i32) {
    %c0_i32 = arith.constant 0 : i32
    %c0_i32_0 = arith.constant 0 : i32
    return %arg0, %c0_i32 : i32, i32
  }
}

</mosaic_0001>

<llo_original>
// kernel: tpu_custom_call.1
$region0: #{tpu_custom_call.1}
  #allocation0 [shape = 'u32[]', space=smem, size = 0x4, offset = 0x4, fixed_abs, tag = 'smem constant byte address 0x4 - core index']
  #allocation1 [shape = 'u32[144,128]{1,0:T(1,128)}', space=vmem, size = 0x12000, scoped, tag = 'internal scratch']
  %s0 = inlined_call_operand.hbm [shape: f32[2,1024], index: 0, kind: input, shape index: {}]
  %s1 = inlined_call_operand.hbm [shape: bf16[1024,256], index: 1, kind: input, shape index: {}]
  %s2 = inlined_call_operand.hbm [shape: f32[2,256], index: 2, kind: output, shape index: {}]
  %s3 = sld [smem:[#allocation0]]
  $region26: #{tpu_custom_call.1} parent=0
    _
  %s5 = ssub.s32 1, %s3
  %s6 = scalar_select 0, %s5, %s3
  $region1: #{tpu_custom_call.1} parent=0
    #allocation2 [shape = 'u8[8192]{0}', space=vmem, size = 0x2000, scoped, tag = 'input window, operand 0, single buffered']
    #allocation3 [shape = 's32[1]{0}', space=sflag, size = 0x4, scoped, tag = 'scoped memory for tpu_custom_call.1']
    #allocation4 [shape = 's32[1]{0}', space=sflag, size = 0x4, scoped, tag = 'scoped memory for tpu_custom_call.1']
    #allocation5 [shape = 'u8[524288]{0}', space=vmem, size = 0x80000, scoped, tag = 'input window, operand 1, single buffered']
    #allocation6 [shape = 's32[1]{0}', space=sflag, size = 0x4, scoped, tag = 'scoped memory for tpu_custom_call.1']
    #allocation7 [shape = 'u8[2048]{0}', space=vmem, size = 0x800, scoped, tag = 'output window, operand 0, single buffered']
    %7 = vsyncpa [#allocation3], 0
    %8 = vsyncpa [#allocation6], 0
    %9 = vsyncpa [#allocation4], 0
    // Predicated region
    $region2: #{tpu_custom_call.1} parent=1 // pred_check
      _
    $region3: #{tpu_custom_call.1} parent=1 // pred_check_branch
      %11 = sbr.rel (0) target = $region5
    $region4: #{tpu_custom_call.1} parent=1 // pred_region
      %s13 = ssub.s32 256, 256
      %14 = vsyncadd [#allocation3], %s13
      %s16 = sshll.u32 [#allocation2], 4
      %s17 = int_to_ptr.vmem [resolvable:$true] %s16
      %19 = dma.hbm_to_vmem [thread:$0]  %s0, 256, %s17, [#allocation3]
    $region5: #{tpu_custom_call.1} parent=1 // pred_fallthru
      _
    // Predicated region
    $region6: #{tpu_custom_call.1} parent=1 // pred_check
      _
    $region7: #{tpu_custom_call.1} parent=1 // pred_check_branch
      %21 = sbr.rel (0) target = $region9
    $region8: #{tpu_custom_call.1} parent=1 // pred_region
      %s23 = ssub.s32 16384, 16384
      %24 = vsyncadd [#allocation6], %s23
      %s25 = sshll.u32 [#allocation5], 4
      %s26 = int_to_ptr.vmem [resolvable:$true] %s25
      %31 = dma.hbm_to_vmem [thread:$0]  %s1, 16384, %s26, [#allocation6], 128, 128, 8
    $region9: #{tpu_custom_call.1} parent=1 // pred_fallthru
      _
    // Predicated region
    $region10: #{tpu_custom_call.1} parent=1 // pred_check
      _
    $region11: #{tpu_custom_call.1} parent=1 // pred_check_branch
      %33 = sbr.rel (0) target = $region13
    $region12: #{tpu_custom_call.1} parent=1 // pred_region
      %34 = dma.done [#allocation3], 256
    $region13: #{tpu_custom_call.1} parent=1 // pred_fallthru
      _
    // Predicated region
    $region14: #{tpu_custom_call.1} parent=1 // pred_check
      _
    $region15: #{tpu_custom_call.1} parent=1 // pred_check_branch
      %36 = sbr.rel (0) target = $region17
    $region16: #{tpu_custom_call.1} parent=1 // pred_region
      %37 = dma.done [#allocation6], 16384
    $region17: #{tpu_custom_call.1} parent=1 // pred_fallthru
      _
    %v38 = vld [vmem:[#allocation2] sm:$0xff]
    %v39 = vld [vmem:[#allocation2 + $0x8] sm:$0xff]
    %v42 = vcombine.high %v38, %v38
    %v44 = vunpack.c.l.s4 1983009808
    %v45 = vunpack.c.0.s8 %v44
    %v46 = vlaneseq
    %v47 = vshrl.u32 %v46, 7
    %v48 = vsub.s32 %v45, %v47
    %v49 = vrot.slane %v38, %v48
    %v51 = vunpack.c.l.s4 1983009808
    %v52 = vunpack.c.0.s8 %v51
    %v53 = vlaneseq
    %v54 = vshrl.u32 %v53, 7
    %v55 = vsub.s32 %v52, %v54
    %v56 = vrot.slane %v42, %v55
    %v57 = vcombine.high %v49, %v49
    %v58 = vcombine.high %v56, %v56
    %v59 = vcombine.high %v39, %v39
    %v61 = vunpack.c.l.s4 1983009808
    %v62 = vunpack.c.0.s8 %v61
    %v63 = vlaneseq
    %v64 = vshrl.u32 %v63, 7
    %v65 = vsub.s32 %v62, %v64
    %v66 = vrot.slane %v39, %v65
    %v68 = vunpack.c.l.s4 1983009808
    %v69 = vunpack.c.0.s8 %v68
    %v70 = vlaneseq
    %v71 = vshrl.u32 %v70, 7
    %v72 = vsub.s32 %v69, %v71
    %v73 = vrot.slane %v59, %v72
    %v74 = vcombine.high %v66, %v66
    %v75 = vcombine.high %v73, %v73
    %v84 = vpack.c.bf16 %v49, %v49
    %v85 = vpack.c.bf16 %v57, %v57
    %v86 = vpack.c.bf16 %v56, %v56
    %v87 = vpack.c.bf16 %v58, %v58
    %v88 = vpack.c.bf16 %v66, %v66
    %v89 = vpack.c.bf16 %v74, %v74
    %v90 = vpack.c.bf16 %v73, %v73
    %v91 = vpack.c.bf16 %v75, %v75
    %v92 = vld [vmem:[#allocation5] sm:$0xff]
    %v93 = vld [vmem:[#allocation5 + $0x8] sm:$0xff]
    %v94 = vld [vmem:[#allocation5 + $0x10] sm:$0xff]
    %v95 = vld [vmem:[#allocation5 + $0x18] sm:$0xff]
    %v96 = vld [vmem:[#allocation5 + $0x20] sm:$0xff]
    %v97 = vld [vmem:[#allocation5 + $0x28] sm:$0xff]
    %v98 = vld [vmem:[#allocation5 + $0x30] sm:$0xff]
    %v99 = vld [vmem:[#allocation5 + $0x38] sm:$0xff]
    %v100 = vld [vmem:[#allocation5 + $0x40] sm:$0xff]
    %v101 = vld [vmem:[#allocation5 + $0x48] sm:$0xff]
    %v102 = vld [vmem:[#allocation5 + $0x50] sm:$0xff]
    %v103 = vld [vmem:[#allocation5 + $0x58] sm:$0xff]
    %v104 = vld [vmem:[#allocation5 + $0x60] sm:$0xff]
    %v105 = vld [vmem:[#allocation5 + $0x68] sm:$0xff]
    %v106 = vld [vmem:[#allocation5 + $0x70] sm:$0xff]
    %v107 = vld [vmem:[#allocation5 + $0x78] sm:$0xff]
    %v108 = vld [vmem:[#allocation5 + $0x80] sm:$0xff]
    %v109 = vld [vmem:[#allocation5 + $0x88] sm:$0xff]
    %v110 = vld [vmem:[#allocation5 + $0x90] sm:$0xff]
    %v111 = vld [vmem:[#allocation5 + $0x98] sm:$0xff]
    %v112 = vld [vmem:[#allocation5 + $0xa0] sm:$0xff]
    %v113 = vld [vmem:[#allocation5 + $0xa8] sm:$0xff]
    %v114 = vld [vmem:[#allocation5 + $0xb0] sm:$0xff]
    %v115 = vld [vmem:[#allocation5 + $0xb8] sm:$0xff]
    %v116 = vld [vmem:[#allocation5 + $0xc0] sm:$0xff]
    %v117 = vld [vmem:[#allocation5 + $0xc8] sm:$0xff]
    %v118 = vld [vmem:[#allocation5 + $0xd0] sm:$0xff]
    %v119 = vld [vmem:[#allocation5 + $0xd8] sm:$0xff]
    %v120 = vld [vmem:[#allocation5 + $0xe0] sm:$0xff]
    %v121 = vld [vmem:[#allocation5 + $0xe8] sm:$0xff]
    %v122 = vld [vmem:[#allocation5 + $0xf0] sm:$0xff]
    %v123 = vld [vmem:[#allocation5 + $0xf8] sm:$0xff]
    %v124 = vld [vmem:[#allocation5 + $0x100] sm:$0xff]
    %v125 = vld [vmem:[#allocation5 + $0x108] sm:$0xff]
    %v126 = vld [vmem:[#allocation5 + $0x110] sm:$0xff]
    %v127 = vld [vmem:[#allocation5 + $0x118] sm:$0xff]
    %v128 = vld [vmem:[#allocation5 + $0x120] sm:$0xff]
    %v129 = vld [vmem:[#allocation5 + $0x128] sm:$0xff]
    %v130 = vld [vmem:[#allocation5 + $0x130] sm:$0xff]
    %v131 = vld [vmem:[#allocation5 + $0x138] sm:$0xff]
    %v132 = vld [vmem:[#allocation5 + $0x140] sm:$0xff]
    %v133 = vld [vmem:[#allocation5 + $0x148] sm:$0xff]
    %v134 = vld [vmem:[#allocation5 + $0x150] sm:$0xff]
    %v135 = vld [vmem:[#allocation5 + $0x158] sm:$0xff]
    %v136 = vld [vmem:[#allocation5 + $0x160] sm:$0xff]
    %v137 = vld [vmem:[#allocation5 + $0x168] sm:$0xff]
    %v138 = vld [vmem:[#allocation5 + $0x170] sm:$0xff]
    %v139 = vld [vmem:[#allocation5 + $0x178] sm:$0xff]
    %v140 = vld [vmem:[#allocation5 + $0x180] sm:$0xff]
    %v141 = vld [vmem:[#allocation5 + $0x188] sm:$0xff]
    %v142 = vld [vmem:[#allocation5 + $0x190] sm:$0xff]
    %v143 = vld [vmem:[#allocation5 + $0x198] sm:$0xff]
    %v144 = vld [vmem:[#allocation5 + $0x1a0] sm:$0xff]
    %v145 = vld [vmem:[#allocation5 + $0x1a8] sm:$0xff]
    %v146 = vld [vmem:[#allocation5 + $0x1b0] sm:$0xff]
    %v147 = vld [vmem:[#allocation5 + $0x1b8] sm:$0xff]
    %v148 = vld [vmem:[#allocation5 + $0x1c0] sm:$0xff]
    %v149 = vld [vmem:[#allocation5 + $0x1c8] sm:$0xff]
    %v150 = vld [vmem:[#allocation5 + $0x1d0] sm:$0xff]
    %v151 = vld [vmem:[#allocation5 + $0x1d8] sm:$0xff]
    %v152 = vld [vmem:[#allocation5 + $0x1e0] sm:$0xff]
    %v153 = vld [vmem:[#allocation5 + $0x1e8] sm:$0xff]
    %v154 = vld [vmem:[#allocation5 + $0x1f0] sm:$0xff]
    %v155 = vld [vmem:[#allocation5 + $0x1f8] sm:$0xff]
    %v156 = vld [vmem:[#allocation5 + $0x200] sm:$0xff]
    %v157 = vld [vmem:[#allocation5 + $0x208] sm:$0xff]
    %v158 = vld [vmem:[#allocation5 + $0x210] sm:$0xff]
    %v159 = vld [vmem:[#allocation5 + $0x218] sm:$0xff]
    %v160 = vld [vmem:[#allocation5 + $0x220] sm:$0xff]
    %v161 = vld [vmem:[#allocation5 + $0x228] sm:$0xff]
    %v162 = vld [vmem:[#allocation5 + $0x230] sm:$0xff]
    %v163 = vld [vmem:[#allocation5 + $0x238] sm:$0xff]
    %v164 = vld [vmem:[#allocation5 + $0x240] sm:$0xff]
    %v165 = vld [vmem:[#allocation5 + $0x248] sm:$0xff]
    %v166 = vld [vmem:[#allocation5 + $0x250] sm:$0xff]
    %v167 = vld [vmem:[#allocation5 + $0x258] sm:$0xff]
    %v168 = vld [vmem:[#allocation5 + $0x260] sm:$0xff]
    %v169 = vld [vmem:[#allocation5 + $0x268] sm:$0xff]
    %v170 = vld [vmem:[#allocation5 + $0x270] sm:$0xff]
    %v171 = vld [vmem:[#allocation5 + $0x278] sm:$0xff]
    %v172 = vld [vmem:[#allocation5 + $0x280] sm:$0xff]
    %v173 = vld [vmem:[#allocation5 + $0x288] sm:$0xff]
    %v174 = vld [vmem:[#allocation5 + $0x290] sm:$0xff]
    %v175 = vld [vmem:[#allocation5 + $0x298] sm:$0xff]
    %v176 = vld [vmem:[#allocation5 + $0x2a0] sm:$0xff]
    %v177 = vld [vmem:[#allocation5 + $0x2a8] sm:$0xff]
    %v178 = vld [vmem:[#allocation5 + $0x2b0] sm:$0xff]
    %v179 = vld [vmem:[#allocation5 + $0x2b8] sm:$0xff]
    %v180 = vld [vmem:[#allocation5 + $0x2c0] sm:$0xff]
    %v181 = vld [vmem:[#allocation5 + $0x2c8] sm:$0xff]
    %v182 = vld [vmem:[#allocation5 + $0x2d0] sm:$0xff]
    %v183 = vld [vmem:[#allocation5 + $0x2d8] sm:$0xff]
    %v184 = vld [vmem:[#allocation5 + $0x2e0] sm:$0xff]
    %v185 = vld [vmem:[#allocation5 + $0x2e8] sm:$0xff]
    %v186 = vld [vmem:[#allocation5 + $0x2f0] sm:$0xff]
    %v187 = vld [vmem:[#allocation5 + $0x2f8] sm:$0xff]
    %v188 = vld [vmem:[#allocation5 + $0x300] sm:$0xff]
    %v189 = vld [vmem:[#allocation5 + $0x308] sm:$0xff]
    %v190 = vld [vmem:[#allocation5 + $0x310] sm:$0xff]
    %v191 = vld [vmem:[#allocation5 + $0x318] sm:$0xff]
    %v192 = vld [vmem:[#allocation5 + $0x320] sm:$0xff]
    %v193 = vld [vmem:[#allocation5 + $0x328] sm:$0xff]
    %v194 = vld [vmem:[#allocation5 + $0x330] sm:$0xff]
    %v195 = vld [vmem:[#allocation5 + $0x338] sm:$0xff]
    %v196 = vld [vmem:[#allocation5 + $0x340] sm:$0xff]
    %v197 = vld [vmem:[#allocation5 + $0x348] sm:$0xff]
    %v198 = vld [vmem:[#allocation5 + $0x350] sm:$0xff]
    %v199 = vld [vmem:[#allocation5 + $0x358] sm:$0xff]
    %v200 = vld [vmem:[#allocation5 + $0x360] sm:$0xff]
    %v201 = vld [vmem:[#allocation5 + $0x368] sm:$0xff]
    %v202 = vld [vmem:[#allocation5 + $0x370] sm:$0xff]
    %v203 = vld [vmem:[#allocation5 + $0x378] sm:$0xff]
    %v204 = vld [vmem:[#allocation5 + $0x380] sm:$0xff]
    %v205 = vld [vmem:[#allocation5 + $0x388] sm:$0xff]
    %v206 = vld [vmem:[#allocation5 + $0x390] sm:$0xff]
    %v207 = vld [vmem:[#allocation5 + $0x398] sm:$0xff]
    %v208 = vld [vmem:[#allocation5 + $0x3a0] sm:$0xff]
    %v209 = vld [vmem:[#allocation5 + $0x3a8] sm:$0xff]
    %v210 = vld [vmem:[#allocation5 + $0x3b0] sm:$0xff]
    %v211 = vld [vmem:[#allocation5 + $0x3b8] sm:$0xff]
    %v212 = vld [vmem:[#allocation5 + $0x3c0] sm:$0xff]
    %v213 = vld [vmem:[#allocation5 + $0x3c8] sm:$0xff]
    %v214 = vld [vmem:[#allocation5 + $0x3d0] sm:$0xff]
    %v215 = vld [vmem:[#allocation5 + $0x3d8] sm:$0xff]
    %v216 = vld [vmem:[#allocation5 + $0x3e0] sm:$0xff]
    %v217 = vld [vmem:[#allocation5 + $0x3e8] sm:$0xff]
    %v218 = vld [vmem:[#allocation5 + $0x3f0] sm:$0xff]
    %v219 = vld [vmem:[#allocation5 + $0x3f8] sm:$0xff]
    %v348 = vunpack.c.l.b16 %v92
    %v349 = vunpack.c.h.b16 %v92
    %v350 = vunpack.c.l.b16 %v93
    %v351 = vunpack.c.h.b16 %v93
    %v352 = vunpack.c.l.b16 %v94
    %v353 = vunpack.c.h.b16 %v94
    %v354 = vunpack.c.l.b16 %v95
    %v355 = vunpack.c.h.b16 %v95
    %v356 = vunpack.c.l.b16 %v96
    %v357 = vunpack.c.h.b16 %v96
    %v358 = vunpack.c.l.b16 %v97
    %v359 = vunpack.c.h.b16 %v97
    %v360 = vunpack.c.l.b16 %v98
    %v361 = vunpack.c.h.b16 %v98
    %v362 = vunpack.c.l.b16 %v99
    %v363 = vunpack.c.h.b16 %v99
    %v364 = vunpack.c.l.b16 %v100
    %v365 = vunpack.c.h.b16 %v100
    %v366 = vunpack.c.l.b16 %v101
    %v367 = vunpack.c.h.b16 %v101
    %v368 = vunpack.c.l.b16 %v102
    %v369 = vunpack.c.h.b16 %v102
    %v370 = vunpack.c.l.b16 %v103
    %v371 = vunpack.c.h.b16 %v103
    %v372 = vunpack.c.l.b16 %v104
    %v373 = vunpack.c.h.b16 %v104
    %v374 = vunpack.c.l.b16 %v105
    %v375 = vunpack.c.h.b16 %v105
    %v376 = vunpack.c.l.b16 %v106
    %v377 = vunpack.c.h.b16 %v106
    %v378 = vunpack.c.l.b16 %v107
    %v379 = vunpack.c.h.b16 %v107
    %v380 = vunpack.c.l.b16 %v108
    %v381 = vunpack.c.h.b16 %v108
    %v382 = vunpack.c.l.b16 %v109
    %v383 = vunpack.c.h.b16 %v109
    %v384 = vunpack.c.l.b16 %v110
    %v385 = vunpack.c.h.b16 %v110
    %v386 = vunpack.c.l.b16 %v111
    %v387 = vunpack.c.h.b16 %v111
    %v388 = vunpack.c.l.b16 %v112
    %v389 = vunpack.c.h.b16 %v112
    %v390 = vunpack.c.l.b16 %v113
    %v391 = vunpack.c.h.b16 %v113
    %v392 = vunpack.c.l.b16 %v114
    %v393 = vunpack.c.h.b16 %v114
    %v394 = vunpack.c.l.b16 %v115
    %v395 = vunpack.c.h.b16 %v115
    %v396 = vunpack.c.l.b16 %v116
    %v397 = vunpack.c.h.b16 %v116
    %v398 = vunpack.c.l.b16 %v117
    %v399 = vunpack.c.h.b16 %v117
    %v400 = vunpack.c.l.b16 %v118
    %v401 = vunpack.c.h.b16 %v118
    %v402 = vunpack.c.l.b16 %v119
    %v403 = vunpack.c.h.b16 %v119
    %v404 = vunpack.c.l.b16 %v120
    %v405 = vunpack.c.h.b16 %v120
    %v406 = vunpack.c.l.b16 %v121
    %v407 = vunpack.c.h.b16 %v121
    %v408 = vunpack.c.l.b16 %v122
    %v409 = vunpack.c.h.b16 %v122
    %v410 = vunpack.c.l.b16 %v123
    %v411 = vunpack.c.h.b16 %v123
    %v412 = vunpack.c.l.b16 %v124
    %v413 = vunpack.c.h.b16 %v124
    %v414 = vunpack.c.l.b16 %v125
    %v415 = vunpack.c.h.b16 %v125
    %v416 = vunpack.c.l.b16 %v126
    %v417 = vunpack.c.h.b16 %v126
    %v418 = vunpack.c.l.b16 %v127
    %v419 = vunpack.c.h.b16 %v127
    %v420 = vunpack.c.l.b16 %v128
    %v421 = vunpack.c.h.b16 %v128
    %v422 = vunpack.c.l.b16 %v129
    %v423 = vunpack.c.h.b16 %v129
    %v424 = vunpack.c.l.b16 %v130
    %v425 = vunpack.c.h.b16 %v130
    %v426 = vunpack.c.l.b16 %v131
    %v427 = vunpack.c.h.b16 %v131
    %v428 = vunpack.c.l.b16 %v132
    %v429 = vunpack.c.h.b16 %v132
    %v430 = vunpack.c.l.b16 %v133
    %v431 = vunpack.c.h.b16 %v133
    %v432 = vunpack.c.l.b16 %v134
    %v433 = vunpack.c.h.b16 %v134
    %v434 = vunpack.c.l.b16 %v135
    %v435 = vunpack.c.h.b16 %v135
    %v436 = vunpack.c.l.b16 %v136
    %v437 = vunpack.c.h.b16 %v136
    %v438 = vunpack.c.l.b16 %v137
    %v439 = vunpack.c.h.b16 %v137
    %v440 = vunpack.c.l.b16 %v138
    %v441 = vunpack.c.h.b16 %v138
    %v442 = vunpack.c.l.b16 %v139
    %v443 = vunpack.c.h.b16 %v139
    %v444 = vunpack.c.l.b16 %v140
    %v445 = vunpack.c.h.b16 %v140
    %v446 = vunpack.c.l.b16 %v141
    %v447 = vunpack.c.h.b16 %v141
    %v448 = vunpack.c.l.b16 %v142
    %v449 = vunpack.c.h.b16 %v142
    %v450 = vunpack.c.l.b16 %v143
    %v451 = vunpack.c.h.b16 %v143
    %v452 = vunpack.c.l.b16 %v144
    %v453 = vunpack.c.h.b16 %v144
    %v454 = vunpack.c.l.b16 %v145
    %v455 = vunpack.c.h.b16 %v145
    %v456 = vunpack.c.l.b16 %v146
    %v457 = vunpack.c.h.b16 %v146
    %v458 = vunpack.c.l.b16 %v147
    %v459 = vunpack.c.h.b16 %v147
    %v460 = vunpack.c.l.b16 %v148
    %v461 = vunpack.c.h.b16 %v148
    %v462 = vunpack.c.l.b16 %v149
    %v463 = vunpack.c.h.b16 %v149
    %v464 = vunpack.c.l.b16 %v150
    %v465 = vunpack.c.h.b16 %v150
    %v466 = vunpack.c.l.b16 %v151
    %v467 = vunpack.c.h.b16 %v151
    %v468 = vunpack.c.l.b16 %v152
    %v469 = vunpack.c.h.b16 %v152
    %v470 = vunpack.c.l.b16 %v153
    %v471 = vunpack.c.h.b16 %v153
    %v472 = vunpack.c.l.b16 %v154
    %v473 = vunpack.c.h.b16 %v154
    %v474 = vunpack.c.l.b16 %v155
    %v475 = vunpack.c.h.b16 %v155
    %v476 = vunpack.c.l.b16 %v156
    %v477 = vunpack.c.h.b16 %v156
    %v478 = vunpack.c.l.b16 %v157
    %v479 = vunpack.c.h.b16 %v157
    %v480 = vunpack.c.l.b16 %v158
    %v481 = vunpack.c.h.b16 %v158
    %v482 = vunpack.c.l.b16 %v159
    %v483 = vunpack.c.h.b16 %v159
    %v484 = vunpack.c.l.b16 %v160
    %v485 = vunpack.c.h.b16 %v160
    %v486 = vunpack.c.l.b16 %v161
    %v487 = vunpack.c.h.b16 %v161
    %v488 = vunpack.c.l.b16 %v162
    %v489 = vunpack.c.h.b16 %v162
    %v490 = vunpack.c.l.b16 %v163
    %v491 = vunpack.c.h.b16 %v163
    %v492 = vunpack.c.l.b16 %v164
    %v493 = vunpack.c.h.b16 %v164
    %v494 = vunpack.c.l.b16 %v165
    %v495 = vunpack.c.h.b16 %v165
    %v496 = vunpack.c.l.b16 %v166
    %v497 = vunpack.c.h.b16 %v166
    %v498 = vunpack.c.l.b16 %v167
    %v499 = vunpack.c.h.b16 %v167
    %v500 = vunpack.c.l.b16 %v168
    %v501 = vunpack.c.h.b16 %v168
    %v502 = vunpack.c.l.b16 %v169
    %v503 = vunpack.c.h.b16 %v169
    %v504 = vunpack.c.l.b16 %v170
    %v505 = vunpack.c.h.b16 %v170
    %v506 = vunpack.c.l.b16 %v171
    %v507 = vunpack.c.h.b16 %v171
    %v508 = vunpack.c.l.b16 %v172
    %v509 = vunpack.c.h.b16 %v172
    %v510 = vunpack.c.l.b16 %v173
    %v511 = vunpack.c.h.b16 %v173
    %v512 = vunpack.c.l.b16 %v174
    %v513 = vunpack.c.h.b16 %v174
    %v514 = vunpack.c.l.b16 %v175
    %v515 = vunpack.c.h.b16 %v175
    %v516 = vunpack.c.l.b16 %v176
    %v517 = vunpack.c.h.b16 %v176
    %v518 = vunpack.c.l.b16 %v177
    %v519 = vunpack.c.h.b16 %v177
    %v520 = vunpack.c.l.b16 %v178
    %v521 = vunpack.c.h.b16 %v178
    %v522 = vunpack.c.l.b16 %v179
    %v523 = vunpack.c.h.b16 %v179
    %v524 = vunpack.c.l.b16 %v180
    %v525 = vunpack.c.h.b16 %v180
    %v526 = vunpack.c.l.b16 %v181
    %v527 = vunpack.c.h.b16 %v181
    %v528 = vunpack.c.l.b16 %v182
    %v529 = vunpack.c.h.b16 %v182
    %v530 = vunpack.c.l.b16 %v183
    %v531 = vunpack.c.h.b16 %v183
    %v532 = vunpack.c.l.b16 %v184
    %v533 = vunpack.c.h.b16 %v184
    %v534 = vunpack.c.l.b16 %v185
    %v535 = vunpack.c.h.b16 %v185
    %v536 = vunpack.c.l.b16 %v186
    %v537 = vunpack.c.h.b16 %v186
    %v538 = vunpack.c.l.b16 %v187
    %v539 = vunpack.c.h.b16 %v187
    %v540 = vunpack.c.l.b16 %v188
    %v541 = vunpack.c.h.b16 %v188
    %v542 = vunpack.c.l.b16 %v189
    %v543 = vunpack.c.h.b16 %v189
    %v544 = vunpack.c.l.b16 %v190
    %v545 = vunpack.c.h.b16 %v190
    %v546 = vunpack.c.l.b16 %v191
    %v547 = vunpack.c.h.b16 %v191
    %v548 = vunpack.c.l.b16 %v192
    %v549 = vunpack.c.h.b16 %v192
    %v550 = vunpack.c.l.b16 %v193
    %v551 = vunpack.c.h.b16 %v193
    %v552 = vunpack.c.l.b16 %v194
    %v553 = vunpack.c.h.b16 %v194
    %v554 = vunpack.c.l.b16 %v195
    %v555 = vunpack.c.h.b16 %v195
    %v556 = vunpack.c.l.b16 %v196
    %v557 = vunpack.c.h.b16 %v196
    %v558 = vunpack.c.l.b16 %v197
    %v559 = vunpack.c.h.b16 %v197
    %v560 = vunpack.c.l.b16 %v198
    %v561 = vunpack.c.h.b16 %v198
    %v562 = vunpack.c.l.b16 %v199
    %v563 = vunpack.c.h.b16 %v199
    %v564 = vunpack.c.l.b16 %v200
    %v565 = vunpack.c.h.b16 %v200
    %v566 = vunpack.c.l.b16 %v201
    %v567 = vunpack.c.h.b16 %v201
    %v568 = vunpack.c.l.b16 %v202
    %v569 = vunpack.c.h.b16 %v202
    %v570 = vunpack.c.l.b16 %v203
    %v571 = vunpack.c.h.b16 %v203
    %v572 = vunpack.c.l.b16 %v204
    %v573 = vunpack.c.h.b16 %v204
    %v574 = vunpack.c.l.b16 %v205
    %v575 = vunpack.c.h.b16 %v205
    %v576 = vunpack.c.l.b16 %v206
    %v577 = vunpack.c.h.b16 %v206
    %v578 = vunpack.c.l.b16 %v207
    %v579 = vunpack.c.h.b16 %v207
    %v580 = vunpack.c.l.b16 %v208
    %v581 = vunpack.c.h.b16 %v208
    %v582 = vunpack.c.l.b16 %v209
    %v583 = vunpack.c.h.b16 %v209
    %v584 = vunpack.c.l.b16 %v210
    %v585 = vunpack.c.h.b16 %v210
    %v586 = vunpack.c.l.b16 %v211
    %v587 = vunpack.c.h.b16 %v211
    %v588 = vunpack.c.l.b16 %v212
    %v589 = vunpack.c.h.b16 %v212
    %v590 = vunpack.c.l.b16 %v213
    %v591 = vunpack.c.h.b16 %v213
    %v592 = vunpack.c.l.b16 %v214
    %v593 = vunpack.c.h.b16 %v214
    %v594 = vunpack.c.l.b16 %v215
    %v595 = vunpack.c.h.b16 %v215
    %v596 = vunpack.c.l.b16 %v216
    %v597 = vunpack.c.h.b16 %v216
    %v598 = vunpack.c.l.b16 %v217
    %v599 = vunpack.c.h.b16 %v217
    %v600 = vunpack.c.l.b16 %v218
    %v601 = vunpack.c.h.b16 %v218
    %v602 = vunpack.c.l.b16 %v219
    %v603 = vunpack.c.h.b16 %v219
    %v604 = vpack.c.b16 %v350, %v348
    %v605 = vpack.c.b16 %v351, %v349
    %v606 = vpack.c.b16 %v354, %v352
    %v607 = vpack.c.b16 %v355, %v353
    %v608 = vpack.c.b16 %v358, %v356
    %v609 = vpack.c.b16 %v359, %v357
    %v610 = vpack.c.b16 %v362, %v360
    %v611 = vpack.c.b16 %v363, %v361
    %v612 = vpack.c.b16 %v366, %v364
    %v613 = vpack.c.b16 %v367, %v365
    %v614 = vpack.c.b16 %v370, %v368
    %v615 = vpack.c.b16 %v371, %v369
    %v616 = vpack.c.b16 %v374, %v372
    %v617 = vpack.c.b16 %v375, %v373
    %v618 = vpack.c.b16 %v378, %v376
    %v619 = vpack.c.b16 %v379, %v377
    %v620 = vpack.c.b16 %v382, %v380
    %v621 = vpack.c.b16 %v383, %v381
    %v622 = vpack.c.b16 %v386, %v384
    %v623 = vpack.c.b16 %v387, %v385
    %v624 = vpack.c.b16 %v390, %v388
    %v625 = vpack.c.b16 %v391, %v389
    %v626 = vpack.c.b16 %v394, %v392
    %v627 = vpack.c.b16 %v395, %v393
    %v628 = vpack.c.b16 %v398, %v396
    %v629 = vpack.c.b16 %v399, %v397
    %v630 = vpack.c.b16 %v402, %v400
    %v631 = vpack.c.b16 %v403, %v401
    %v632 = vpack.c.b16 %v406, %v404
    %v633 = vpack.c.b16 %v407, %v405
    %v634 = vpack.c.b16 %v410, %v408
    %v635 = vpack.c.b16 %v411, %v409
    %v636 = vpack.c.b16 %v414, %v412
    %v637 = vpack.c.b16 %v415, %v413
    %v638 = vpack.c.b16 %v418, %v416
    %v639 = vpack.c.b16 %v419, %v417
    %v640 = vpack.c.b16 %v422, %v420
    %v641 = vpack.c.b16 %v423, %v421
    %v642 = vpack.c.b16 %v426, %v424
    %v643 = vpack.c.b16 %v427, %v425
    %v644 = vpack.c.b16 %v430, %v428
    %v645 = vpack.c.b16 %v431, %v429
    %v646 = vpack.c.b16 %v434, %v432
    %v647 = vpack.c.b16 %v435, %v433
    %v648 = vpack.c.b16 %v438, %v436
    %v649 = vpack.c.b16 %v439, %v437
    %v650 = vpack.c.b16 %v442, %v440
    %v651 = vpack.c.b16 %v443, %v441
    %v652 = vpack.c.b16 %v446, %v444
    %v653 = vpack.c.b16 %v447, %v445
    %v654 = vpack.c.b16 %v450, %v448
    %v655 = vpack.c.b16 %v451, %v449
    %v656 = vpack.c.b16 %v454, %v452
    %v657 = vpack.c.b16 %v455, %v453
    %v658 = vpack.c.b16 %v458, %v456
    %v659 = vpack.c.b16 %v459, %v457
    %v660 = vpack.c.b16 %v462, %v460
    %v661 = vpack.c.b16 %v463, %v461
    %v662 = vpack.c.b16 %v466, %v464
    %v663 = vpack.c.b16 %v467, %v465
    %v664 = vpack.c.b16 %v470, %v468
    %v665 = vpack.c.b16 %v471, %v469
    %v666 = vpack.c.b16 %v474, %v472
    %v667 = vpack.c.b16 %v475, %v473
    %v668 = vpack.c.b16 %v478, %v476
    %v669 = vpack.c.b16 %v479, %v477
    %v670 = vpack.c.b16 %v482, %v480
    %v671 = vpack.c.b16 %v483, %v481
    %v672 = vpack.c.b16 %v486, %v484
    %v673 = vpack.c.b16 %v487, %v485
    %v674 = vpack.c.b16 %v490, %v488
    %v675 = vpack.c.b16 %v491, %v489
    %v676 = vpack.c.b16 %v494, %v492
    %v677 = vpack.c.b16 %v495, %v493
    %v678 = vpack.c.b16 %v498, %v496
    %v679 = vpack.c.b16 %v499, %v497
    %v680 = vpack.c.b16 %v502, %v500
    %v681 = vpack.c.b16 %v503, %v501
    %v682 = vpack.c.b16 %v506, %v504
    %v683 = vpack.c.b16 %v507, %v505
    %v684 = vpack.c.b16 %v510, %v508
    %v685 = vpack.c.b16 %v511, %v509
    %v686 = vpack.c.b16 %v514, %v512
    %v687 = vpack.c.b16 %v515, %v513
    %v688 = vpack.c.b16 %v518, %v516
    %v689 = vpack.c.b16 %v519, %v517
    %v690 = vpack.c.b16 %v522, %v520
    %v691 = vpack.c.b16 %v523, %v521
    %v692 = vpack.c.b16 %v526, %v524
    %v693 = vpack.c.b16 %v527, %v525
    %v694 = vpack.c.b16 %v530, %v528
    %v695 = vpack.c.b16 %v531, %v529
    %v696 = vpack.c.b16 %v534, %v532
    %v697 = vpack.c.b16 %v535, %v533
    %v698 = vpack.c.b16 %v538, %v536
    %v699 = vpack.c.b16 %v539, %v537
    %v700 = vpack.c.b16 %v542, %v540
    %v701 = vpack.c.b16 %v543, %v541
    %v702 = vpack.c.b16 %v546, %v544
    %v703 = vpack.c.b16 %v547, %v545
    %v704 = vpack.c.b16 %v550, %v548
    %v705 = vpack.c.b16 %v551, %v549
    %v706 = vpack.c.b16 %v554, %v552
    %v707 = vpack.c.b16 %v555, %v553
    %v708 = vpack.c.b16 %v558, %v556
    %v709 = vpack.c.b16 %v559, %v557
    %v710 = vpack.c.b16 %v562, %v560
    %v711 = vpack.c.b16 %v563, %v561
    %v712 = vpack.c.b16 %v566, %v564
    %v713 = vpack.c.b16 %v567, %v565
    %v714 = vpack.c.b16 %v570, %v568
    %v715 = vpack.c.b16 %v571, %v569
    %v716 = vpack.c.b16 %v574, %v572
    %v717 = vpack.c.b16 %v575, %v573
    %v718 = vpack.c.b16 %v578, %v576
    %v719 = vpack.c.b16 %v579, %v577
    %v720 = vpack.c.b16 %v582, %v580
    %v721 = vpack.c.b16 %v583, %v581
    %v722 = vpack.c.b16 %v586, %v584
    %v723 = vpack.c.b16 %v587, %v585
    %v724 = vpack.c.b16 %v590, %v588
    %v725 = vpack.c.b16 %v591, %v589
    %v726 = vpack.c.b16 %v594, %v592
    %v727 = vpack.c.b16 %v595, %v593
    %v728 = vpack.c.b16 %v598, %v596
    %v729 = vpack.c.b16 %v599, %v597
    %v730 = vpack.c.b16 %v602, %v600
    %v731 = vpack.c.b16 %v603, %v601
    %860 = vmatprep.subr.bf16.mxu0 %v605
    %861 = vmatpush1.bf16.msra.mxu0 %v604
    %862 = vmatprep.subr.bf16.mxu0 %v607
    %863 = vmatpush1.bf16.msra.mxu0 %v606
    %864 = vmatprep.subr.bf16.mxu0 %v609
    %865 = vmatpush1.bf16.msra.mxu0 %v608
    %866 = vmatprep.subr.bf16.mxu0 %v611
    %867 = vmatpush1.bf16.msra.mxu0 %v610
    %868 = vmatprep.subr.bf16.mxu0 %v613
    %869 = vmatpush1.bf16.msra.mxu0 %v612
    %870 = vmatprep.subr.bf16.mxu0 %v615
    %871 = vmatpush1.bf16.msra.mxu0 %v614
    %872 = vmatprep.subr.bf16.mxu0 %v617
    %873 = vmatpush1.bf16.msra.mxu0 %v616
    %874 = vmatprep.subr.bf16.mxu0 %v619
    %875 = vmatpush1.bf16.msra.mxu0 %v618
    %876 = vmatprep.subr.bf16.mxu0 %v621
    %877 = vmatpush1.bf16.msra.mxu0 %v620
    %878 = vmatprep.subr.bf16.mxu0 %v623
    %879 = vmatpush1.bf16.msra.mxu0 %v622
    %880 = vmatprep.subr.bf16.mxu0 %v625
    %881 = vmatpush1.bf16.msra.mxu0 %v624
    %882 = vmatprep.subr.bf16.mxu0 %v627
    %883 = vmatpush1.bf16.msra.mxu0 %v626
    %884 = vmatprep.subr.bf16.mxu0 %v629
    %885 = vmatpush1.bf16.msra.mxu0 %v628
    %886 = vmatprep.subr.bf16.mxu0 %v631
    %887 = vmatpush1.bf16.msra.mxu0 %v630
    %888 = vmatprep.subr.bf16.mxu0 %v633
    %889 = vmatpush1.bf16.msra.mxu0 %v632
    %890 = vmatprep.subr.bf16.mxu0 %v635
    %891 = vmatpush1.bf16.msra.mxu0 %v634
    %892 = vmatprep.mubr.bf16.mxu0 %v85
    %893 = vmatmul.mubr.bf16.gmra.mrb[0].mxu0 %v84
    %v894 = vpop.f32.mrb[0].mxu0
    %v895 = vadd.f32 0.0, %v894
    %v896 = vpop.f32.mrb[0].mxu0
    %v897 = vadd.f32 0.0, %v896
    %v898 = vpop.f32.mrb[0].mxu0
    %v899 = vpop.f32.mrb[0].mxu0
    %900 = vdwg.mxu0
    %901 = vmatprep.subr.bf16.mxu0 %v637
    %902 = vmatpush1.bf16.msra.mxu0 %v636
    %903 = vmatprep.subr.bf16.mxu0 %v639
    %904 = vmatpush1.bf16.msra.mxu0 %v638
    %905 = vmatprep.subr.bf16.mxu0 %v641
    %906 = vmatpush1.bf16.msra.mxu0 %v640
    %907 = vmatprep.subr.bf16.mxu0 %v643
    %908 = vmatpush1.bf16.msra.mxu0 %v642
    %909 = vmatprep.subr.bf16.mxu0 %v645
    %910 = vmatpush1.bf16.msra.mxu0 %v644
    %911 = vmatprep.subr.bf16.mxu0 %v647
    %912 = vmatpush1.bf16.msra.mxu0 %v646
    %913 = vmatprep.subr.bf16.mxu0 %v649
    %914 = vmatpush1.bf16.msra.mxu0 %v648
    %915 = vmatprep.subr.bf16.mxu0 %v651
    %916 = vmatpush1.bf16.msra.mxu0 %v650
    %917 = vmatprep.subr.bf16.mxu0 %v653
    %918 = vmatpush1.bf16.msra.mxu0 %v652
    %919 = vmatprep.subr.bf16.mxu0 %v655
    %920 = vmatpush1.bf16.msra.mxu0 %v654
    %921 = vmatprep.subr.bf16.mxu0 %v657
    %922 = vmatpush1.bf16.msra.mxu0 %v656
    %923 = vmatprep.subr.bf16.mxu0 %v659
    %924 = vmatpush1.bf16.msra.mxu0 %v658
    %925 = vmatprep.subr.bf16.mxu0 %v661
    %926 = vmatpush1.bf16.msra.mxu0 %v660
    %927 = vmatprep.subr.bf16.mxu0 %v663
    %928 = vmatpush1.bf16.msra.mxu0 %v662
    %929 = vmatprep.subr.bf16.mxu0 %v665
    %930 = vmatpush1.bf16.msra.mxu0 %v664
    %931 = vmatprep.subr.bf16.mxu0 %v667
    %932 = vmatpush1.bf16.msra.mxu0 %v666
    %933 = vmatprep.mubr.bf16.mxu0 %v87
    %934 = vmatmul.mubr.bf16.gmra.mrb[0].mxu0 %v86
    %v935 = vpop.f32.mrb[0].mxu0
    %v936 = vadd.f32 %v895, %v935
    %v937 = vpop.f32.mrb[0].mxu0
    %v938 = vadd.f32 %v897, %v937
    %v939 = vpop.f32.mrb[0].mxu0
    %v940 = vpop.f32.mrb[0].mxu0
    %941 = vdwg.mxu0
    %942 = vmatprep.subr.bf16.mxu0 %v669
    %943 = vmatpush1.bf16.msra.mxu0 %v668
    %944 = vmatprep.subr.bf16.mxu0 %v671
    %945 = vmatpush1.bf16.msra.mxu0 %v670
    %946 = vmatprep.subr.bf16.mxu0 %v673
    %947 = vmatpush1.bf16.msra.mxu0 %v672
    %948 = vmatprep.subr.bf16.mxu0 %v675
    %949 = vmatpush1.bf16.msra.mxu0 %v674
    %950 = vmatprep.subr.bf16.mxu0 %v677
    %951 = vmatpush1.bf16.msra.mxu0 %v676
    %952 = vmatprep.subr.bf16.mxu0 %v679
    %953 = vmatpush1.bf16.msra.mxu0 %v678
    %954 = vmatprep.subr.bf16.mxu0 %v681
    %955 = vmatpush1.bf16.msra.mxu0 %v680
    %956 = vmatprep.subr.bf16.mxu0 %v683
    %957 = vmatpush1.bf16.msra.mxu0 %v682
    %958 = vmatprep.subr.bf16.mxu0 %v685
    %959 = vmatpush1.bf16.msra.mxu0 %v684
    %960 = vmatprep.subr.bf16.mxu0 %v687
    %961 = vmatpush1.bf16.msra.mxu0 %v686
    %962 = vmatprep.subr.bf16.mxu0 %v689
    %963 = vmatpush1.bf16.msra.mxu0 %v688
    %964 = vmatprep.subr.bf16.mxu0 %v691
    %965 = vmatpush1.bf16.msra.mxu0 %v690
    %966 = vmatprep.subr.bf16.mxu0 %v693
    %967 = vmatpush1.bf16.msra.mxu0 %v692
    %968 = vmatprep.subr.bf16.mxu0 %v695
    %969 = vmatpush1.bf16.msra.mxu0 %v694
    %970 = vmatprep.subr.bf16.mxu0 %v697
    %971 = vmatpush1.bf16.msra.mxu0 %v696
    %972 = vmatprep.subr.bf16.mxu0 %v699
    %973 = vmatpush1.bf16.msra.mxu0 %v698
    %974 = vmatprep.mubr.bf16.mxu0 %v89
    %975 = vmatmul.mubr.bf16.gmra.mrb[0].mxu0 %v88
    %v976 = vpop.f32.mrb[0].mxu0
    %v977 = vadd.f32 %v936, %v976
    %v978 = vpop.f32.mrb[0].mxu0
    %v979 = vadd.f32 %v938, %v978
    %v980 = vpop.f32.mrb[0].mxu0
    %v981 = vpop.f32.mrb[0].mxu0
    %982 = vdwg.mxu0
    %983 = vmatprep.subr.bf16.mxu0 %v701
    %984 = vmatpush1.bf16.msra.mxu0 %v700
    %985 = vmatprep.subr.bf16.mxu0 %v703
    %986 = vmatpush1.bf16.msra.mxu0 %v702
    %987 = vmatprep.subr.bf16.mxu0 %v705
    %988 = vmatpush1.bf16.msra.mxu0 %v704
    %989 = vmatprep.subr.bf16.mxu0 %v707
    %990 = vmatpush1.bf16.msra.mxu0 %v706
    %991 = vmatprep.subr.bf16.mxu0 %v709
    %992 = vmatpush1.bf16.msra.mxu0 %v708
    %993 = vmatprep.subr.bf16.mxu0 %v711
    %994 = vmatpush1.bf16.msra.mxu0 %v710
    %995 = vmatprep.subr.bf16.mxu0 %v713
    %996 = vmatpush1.bf16.msra.mxu0 %v712
    %997 = vmatprep.subr.bf16.mxu0 %v715
    %998 = vmatpush1.bf16.msra.mxu0 %v714
    %999 = vmatprep.subr.bf16.mxu0 %v717
    %1000 = vmatpush1.bf16.msra.mxu0 %v716
    %1001 = vmatprep.subr.bf16.mxu0 %v719
    %1002 = vmatpush1.bf16.msra.mxu0 %v718
    %1003 = vmatprep.subr.bf16.mxu0 %v721
    %1004 = vmatpush1.bf16.msra.mxu0 %v720
    %1005 = vmatprep.subr.bf16.mxu0 %v723
    %1006 = vmatpush1.bf16.msra.mxu0 %v722
    %1007 = vmatprep.subr.bf16.mxu0 %v725
    %1008 = vmatpush1.bf16.msra.mxu0 %v724
    %1009 = vmatprep.subr.bf16.mxu0 %v727
    %1010 = vmatpush1.bf16.msra.mxu0 %v726
    %1011 = vmatprep.subr.bf16.mxu0 %v729
    %1012 = vmatpush1.bf16.msra.mxu0 %v728
    %1013 = vmatprep.subr.bf16.mxu0 %v731
    %1014 = vmatpush1.bf16.msra.mxu0 %v730
    %1015 = vmatprep.mubr.bf16.mxu0 %v91
    %1016 = vmatmul.mubr.bf16.gmra.mrb[0].mxu0 %v90
    %v1017 = vpop.f32.mrb[0].mxu0
    %v1018 = vadd.f32 %v977, %v1017
    %v1019 = vpop.f32.mrb[0].mxu0
    %v1020 = vadd.f32 %v979, %v1019
    %v1021 = vpop.f32.mrb[0].mxu0
    %v1022 = vpop.f32.mrb[0].mxu0
    %1023 = vdwg.mxu0
    %v1026 = vcombine.low %v1018, %v1020
    %v1028 = vunpack.c.l.s4 1983009808
    %v1029 = vunpack.c.0.s8 %v1028
    %v1030 = vlaneseq
    %v1031 = vshrl.u32 %v1030, 7
    %v1032 = vsub.s32 %v1029, %v1031
    %v1033 = vrot.slane %v1026, %v1032
    %1035 = vst [vmem:[#allocation7] sm:$0xf] %v1033
    // Predicated region
    $region18: #{tpu_custom_call.1} parent=1 // pred_check
      _
    $region19: #{tpu_custom_call.1} parent=1 // pred_check_branch
      %1037 = sbr.rel (0) target = $region21
    $region20: #{tpu_custom_call.1} parent=1 // pred_region
      %s1039 = ssub.s32 64, 64
      %1040 = vsyncadd [#allocation4], %s1039
      %s1042 = sshll.u32 [#allocation7], 4
      %s1043 = int_to_ptr.vmem [resolvable:$true] %s1042
      %1045 = dma.vmem_to_hbm [thread:$0]  %s1043, 64, %s2, [#allocation4]
    $region21: #{tpu_custom_call.1} parent=1 // pred_fallthru
      _
    // Predicated region
    $region22: #{tpu_custom_call.1} parent=1 // pred_check
      _
    $region23: #{tpu_custom_call.1} parent=1 // pred_check_branch
      %1047 = sbr.rel (0) target = $region25
    $region24: #{tpu_custom_call.1} parent=1 // pred_region
      %1048 = dma.done [#allocation4], 64
    $region25: #{tpu_custom_call.1} parent=1 // pred_fallthru
      _
    %1049 = vsyncpa [#allocation3], 1
    %1050 = vsyncpa [#allocation6], 1
    %1051 = vsyncpa [#allocation4], 1

</llo_original>
